<compile_context>
chip_gen: v7x
topology: tpu7x:2x2x1
jax: 0.10.0
libtpu: 0.0.40
codegen_flags: <defaults>
</compile_context>

<pallas_src>
import functools

import jax
import jax.numpy as jnp
from jax.experimental import pallas as pl
from jax.experimental.pallas import tpu as pltpu

_LANE_WIDTHS = (4096, 2048, 1024, 512, 256, 128)        # lane-dense slab widths

# Per-generation tuning (per-buffer block target, scoped-VMEM default).
_TARGET_BLOCK_BYTES = {"v5": 2 << 20, "v6": 4 << 20, "v7": 8 << 20}
_SCOPED_VMEM_DEFAULT = {"v5": 16 << 20, "v6": 32 << 20, "v7": 32 << 20}
_DEFAULT_TARGET_BYTES = 2 << 20
_DEFAULT_SCOPED_VMEM = 16 << 20


def _tpu_generation():
    try:
        kind = jax.devices()[0].device_kind.lower()
    except Exception:
        return None
    for gen in ("v7", "v6", "v5"):
        if gen in kind:
            return gen
    return None


def _sublane_multiple(itemsize):
    # Native sublane packing: 8 rows for 32-bit, 16 for 16-bit, 32 for 8-bit.
    return {4: 8, 2: 16, 1: 32}.get(itemsize, 8)


def _fake_quant_kernel(x_ref, o_ref, *, inv_scale, scale, zero_point,
                       quant_min, quant_max):
    # Upcast in-kernel (VPU work is hidden under DMA).
    x = x_ref[...].astype(jnp.float32)
    # jnp.round is round-half-to-even, matching std::nearbyint in PyTorch.
    q = jnp.round(x * inv_scale + zero_point)
    q = jnp.clip(q, quant_min, quant_max)
    # Unfolded affine for bit-exact parity with torch.fake_quantize_*.
    o_ref[...] = ((q - zero_point) * scale).astype(o_ref.dtype)


def _fake_quant_jnp(x, inv_scale, scale, zero_point, quant_min, quant_max):
    # Plain-jnp path for tiny ragged tails (and the exact reference formula).
    q = jnp.round(x.astype(jnp.float32) * inv_scale + zero_point)
    q = jnp.clip(q, quant_min, quant_max)
    return ((q - zero_point) * scale).astype(x.dtype)


def per_tensor_fake_quant(x, scale, zero_point, quant_min, quant_max,
                          *, donate_input=False):
    """Elementwise per-tensor fake quantization (Pallas TPU kernel)."""
    # TODO(synk): if scale/zero_point ever arrive as traced values, route them
    # through SMEM scalar prefetch instead of baking them as Python constants.
    orig_shape = x.shape
    dtype = x.dtype
    itemsize = jnp.dtype(dtype).itemsize
    sublane = _sublane_multiple(itemsize)
    n = x.size

    inv_scale = float(1.0 / scale)
    s = float(scale)
    zp = float(zero_point)
    qmin = float(quant_min)
    qmax = float(quant_max)

    if n == 0:
        return x

    flat = x.reshape(-1)

    # Widest lane-dense width that divides n -> free reshape, no tail.
    width = next((w for w in _LANE_WIDTHS if n % w == 0), None)
    tail = None
    if width is None:
        # Ragged: run the 128-aligned prefix through the kernel, handle the
        # <128-element tail with plain jnp (no full-tensor pad/slice pass).
        width = 128
        main = (n // width) * width
        if main == 0:
            return _fake_quant_jnp(flat, inv_scale, s, zp, qmin,
                                   qmax).reshape(orig_shape)
        tail = flat[main:]
        flat = flat[:main]
        n = main

    rows = n // width
    x2d = flat.reshape(rows, width)

    gen = _tpu_generation()
    target_bytes = _TARGET_BLOCK_BYTES.get(gen, _DEFAULT_TARGET_BYTES)
    scoped_default = _SCOPED_VMEM_DEFAULT.get(gen, _DEFAULT_SCOPED_VMEM)

    # Dtype-aware block sizing.
    target_rows = max(sublane, target_bytes // (width * itemsize))
    total_bytes = rows * width * itemsize
    if target_rows >= rows:
        if total_bytes > (1 << 20) and rows >= 2 * sublane:
            # Guarantee >=2 grid steps so v7x's two TensorCores both engage.
            half = -(-rows // 2)
            block_rows = -(-half // sublane) * sublane
        else:
            block_rows = rows                 # single block covers row dim
    else:
        block_rows = max(sublane, (target_rows // sublane) * sublane)

    grid = (pl.cdiv(rows, block_rows),)       # row overhang handled by Pallas

    kernel = functools.partial(
        _fake_quant_kernel,
        inv_scale=inv_scale, scale=s, zero_point=zp,
        quant_min=qmin, quant_max=qmax,
    )

    # Raise the scoped-VMEM limit only if the 4 pipelined buffers (in + out,
    # double-buffered) plus Mosaic scratch headroom would exceed the default.
    block_bytes = block_rows * width * itemsize
    vmem_need = 4 * block_bytes + (8 << 20)
    cp_kwargs = dict(dimension_semantics=("parallel",))
    if vmem_need > scoped_default:
        cp_kwargs["vmem_limit_bytes"] = int(vmem_need)

    call_kwargs = {}
    if donate_input and tail is None:
        # In-place fake-quant (typical QAT use where x is dead afterwards):
        # halves peak HBM footprint.
        call_kwargs["input_output_aliases"] = {0: 0}

    out2d = pl.pallas_call(
        kernel,
        out_shape=jax.ShapeDtypeStruct((rows, width), dtype),
        grid=grid,
        in_specs=[pl.BlockSpec((block_rows, width), lambda i: (i, 0))],
        out_specs=pl.BlockSpec((block_rows, width), lambda i: (i, 0)),
        compiler_params=pltpu.CompilerParams(**cp_kwargs),
        **call_kwargs,
    )(x2d)

    out = out2d.reshape(-1)
    if tail is not None:
        out = jnp.concatenate(
            [out, _fake_quant_jnp(tail, inv_scale, s, zp, qmin, qmax)])
    return out.reshape(orig_shape)


def _reference(x, scale, zero_point, quant_min, quant_max):
    return _fake_quant_jnp(x, 1.0 / scale, scale, zero_point,
                           quant_min, quant_max)


def _check(x, scale, zero_point, quant_min, quant_max, atol, **kw):
    out = per_tensor_fake_quant(x, scale, zero_point, quant_min, quant_max, **kw)
    out = jax.block_until_ready(out)
    ref = _reference(x, scale, zero_point, quant_min, quant_max)
    assert out.shape == x.shape and out.dtype == x.dtype
    assert jnp.allclose(out.astype(jnp.float32), ref.astype(jnp.float32),
                        atol=atol, rtol=0), "mismatch vs reference"
    return out


if __name__ == "__main__":
    # "Module parameters" (PerTensorFakeQuant.__init__ args).
    scale, zero_point, quant_min, quant_max = 0.1, 128, 0, 255

    key = jax.random.PRNGKey(0)
    k0, k1, k2, k3, k4 = jax.random.split(key, 5)

    # Primary case: NCHW f32, lane-dense path.
    x = jax.random.normal(k0, (2, 4, 16, 16), dtype=jnp.float32)
    _check(x, scale, zero_point, quant_min, quant_max, atol=1e-6)

    # bf16 (dtype-aware sizing / in-kernel cast path).
    x_bf = jax.random.normal(k1, (2, 4, 16, 16), dtype=jnp.bfloat16)
    _check(x_bf, scale, zero_point, quant_min, quant_max, atol=1e-2)

    # Ragged size: 128-aligned prefix through kernel + plain-jnp tail.
    x_rg = jax.random.normal(k2, (5, 131), dtype=jnp.float32)
    _check(x_rg, scale, zero_point, quant_min, quant_max, atol=1e-6)

    # Tiny (<128 elements): pure jnp fallback.
    x_sm = jax.random.normal(k3, (3, 7), dtype=jnp.float32)
    _check(x_sm, scale, zero_point, quant_min, quant_max, atol=1e-6)

    # >1 MiB tensor: exercises the >=2-grid-step (dual-TensorCore) branch and
    # the input_output_aliases (donated-input) path.
    x_lg = jax.random.normal(k4, (256, 2048), dtype=jnp.float32)
    _check(x_lg, scale, zero_point, quant_min, quant_max, atol=1e-6,
           donate_input=True)

    print("KERNEL_OK")
</pallas_src>

<mosaic_0001>
module attributes {stable_mosaic.version = 11 : i64} {
  func.func @_fake_quant_kernel(%arg0: i32, %arg1: memref<1x2048xf32, #tpu.memory_space<vmem>>, %arg2: memref<1x2048xf32, #tpu.memory_space<vmem>>) attributes {dimension_semantics = [#tpu.dimension_semantics<parallel>], iteration_bounds = array<i64: 1>, scalar_prefetch = 0 : i64, scratch_operands = 0 : i64, tpu.core_type = #tpu.core_type<tc>, window_params = [{transform_indices = @transform_0, window_bounds = array<i64: 1, 2048>}, {transform_indices = @transform_1, window_bounds = array<i64: 1, 2048>}]} {
    %c0 = arith.constant 0 : index
    %c0_0 = arith.constant 0 : index
    %0 = vector.load %arg1[%c0, %c0_0] : memref<1x2048xf32, #tpu.memory_space<vmem>>, vector<1x2048xf32>
    %cst = arith.constant 1.000000e+01 : f32
    %1 = vector.broadcast %cst : f32 to vector<1x2048xf32>
    %2 = arith.mulf %0, %1 : vector<1x2048xf32>
    %cst_1 = arith.constant 1.280000e+02 : f32
    %3 = vector.broadcast %cst_1 : f32 to vector<1x2048xf32>
    %4 = arith.addf %2, %3 : vector<1x2048xf32>
    %5 = math.roundeven %4 : vector<1x2048xf32>
    %cst_2 = arith.constant 0.000000e+00 : f32
    %cst_3 = arith.constant 2.550000e+02 : f32
    %6 = vector.broadcast %cst_2 : f32 to vector<1x2048xf32>
    %7 = arith.maximumf %6, %5 : vector<1x2048xf32>
    %8 = vector.broadcast %cst_3 : f32 to vector<1x2048xf32>
    %9 = arith.minimumf %8, %7 : vector<1x2048xf32>
    %cst_4 = arith.constant 1.280000e+02 : f32
    %10 = vector.broadcast %cst_4 : f32 to vector<1x2048xf32>
    %11 = arith.subf %9, %10 : vector<1x2048xf32>
    %cst_5 = arith.constant 1.000000e-01 : f32
    %12 = vector.broadcast %cst_5 : f32 to vector<1x2048xf32>
    %13 = arith.mulf %11, %12 : vector<1x2048xf32>
    %c0_6 = arith.constant 0 : index
    %c0_7 = arith.constant 0 : index
    %14 = vector.load %arg2[%c0_6, %c0_7] : memref<1x2048xf32, #tpu.memory_space<vmem>>, vector<1x2048xf32>
    tpu.vector_store %arg2[%c0_6, %c0_7], %13 {strides = array<i32>} : memref<1x2048xf32, #tpu.memory_space<vmem>>, vector<1x2048xf32>,
    return
  }
  func.func @transform_0(%arg0: i32) -> (i32, i32) {
    %c0_i32 = arith.constant 0 : i32
    %c0_i32_0 = arith.constant 0 : i32
    return %arg0, %c0_i32 : i32, i32
  }
  func.func @transform_1(%arg0: i32) -> (i32, i32) {
    %c0_i32 = arith.constant 0 : i32
    %c0_i32_0 = arith.constant 0 : i32
    return %arg0, %c0_i32 : i32, i32
  }
}

</mosaic_0001>

<llo_original>
// kernel: tpu_custom_call.1
$region0: #{tpu_custom_call.1}
  #allocation0 [shape = 'u32[]', space=smem, size = 0x4, offset = 0x4, fixed_abs, tag = 'smem constant byte address 0x4 - core index']
  #allocation1 [shape = 'u32[144,128]{1,0:T(1,128)}', space=vmem, size = 0x12000, scoped, tag = 'internal scratch']
  %s0 = inlined_call_operand.hbm [shape: f32[1,2048], index: 0, kind: input, shape index: {}]
  %s1 = inlined_call_operand.hbm [shape: f32[1,2048], index: 1, kind: output, shape index: {}]
  %s2 = sld [smem:[#allocation0]]
  $region18: #{tpu_custom_call.1} parent=0
    _
  %s4 = ssub.s32 1, %s2
  %s5 = scalar_select 0, %s4, %s2
  $region1: #{tpu_custom_call.1} parent=0
    #allocation2 [shape = 'u8[8192]{0}', space=vmem, size = 0x2000, scoped, tag = 'input window, operand 0, single buffered']
    #allocation3 [shape = 's32[1]{0}', space=sflag, size = 0x4, scoped, tag = 'scoped memory for tpu_custom_call.1']
    #allocation4 [shape = 's32[1]{0}', space=sflag, size = 0x4, scoped, tag = 'scoped memory for tpu_custom_call.1']
    #allocation5 [shape = 'u8[8192]{0}', space=vmem, size = 0x2000, scoped, tag = 'output window, operand 0, single buffered']
    %6 = vsyncpa [#allocation3], 0
    %7 = vsyncpa [#allocation4], 0
    // Predicated region
    $region2: #{tpu_custom_call.1} parent=1 // pred_check
      _
    $region3: #{tpu_custom_call.1} parent=1 // pred_check_branch
      %9 = sbr.rel (0) target = $region5
    $region4: #{tpu_custom_call.1} parent=1 // pred_region
      %s11 = ssub.s32 256, 256
      %12 = vsyncadd [#allocation3], %s11
      %s14 = sshll.u32 [#allocation2], 4
      %s15 = int_to_ptr.vmem [resolvable:$true] %s14
      %17 = dma.hbm_to_vmem [thread:$0]  %s0, 256, %s15, [#allocation3]
    $region5: #{tpu_custom_call.1} parent=1 // pred_fallthru
      _
    // Predicated region
    $region6: #{tpu_custom_call.1} parent=1 // pred_check
      _
    $region7: #{tpu_custom_call.1} parent=1 // pred_check_branch
      %19 = sbr.rel (0) target = $region9
    $region8: #{tpu_custom_call.1} parent=1 // pred_region
      %20 = dma.done [#allocation3], 256
    $region9: #{tpu_custom_call.1} parent=1 // pred_fallthru
      _
    %v21 = vld [vmem:[#allocation2] sm:$0xff]
    %v22 = vld [vmem:[#allocation2 + $0x8] sm:$0xff]
    %v23 = vmul.f32 %v21, 10.0
    %v24 = vmul.f32 %v22, 10.0
    %v25 = vadd.f32 %v23, 128.0
    %v26 = vadd.f32 %v24, 128.0
    %v27 = vround.ne.pseudo %v25
    %v28 = vround.ne.pseudo %v26
    %v29 = vmax.f32 %v27, 0.0
    %v30 = vmax.f32 %v28, 0.0
    %v31 = vmin.f32 %v29, 255.0
    %v32 = vmin.f32 %v30, 255.0
    %v33 = vsub.f32 %v31, 128.0
    %v34 = vsub.f32 %v32, 128.0
    %v35 = vmul.f32 %v33, 0.1
    %v36 = vmul.f32 %v34, 0.1
    %37 = vst [vmem:[#allocation5] sm:$0xff] %v35
    %38 = vst [vmem:[#allocation5 + $0x8] sm:$0xff] %v36
    // Predicated region
    $region10: #{tpu_custom_call.1} parent=1 // pred_check
      _
    $region11: #{tpu_custom_call.1} parent=1 // pred_check_branch
      %40 = sbr.rel (0) target = $region13
    $region12: #{tpu_custom_call.1} parent=1 // pred_region
      %s42 = ssub.s32 256, 256
      %43 = vsyncadd [#allocation4], %s42
      %s45 = sshll.u32 [#allocation5], 4
      %s46 = int_to_ptr.vmem [resolvable:$true] %s45
      %48 = dma.vmem_to_hbm [thread:$0]  %s46, 256, %s1, [#allocation4]
    $region13: #{tpu_custom_call.1} parent=1 // pred_fallthru
      _
    // Predicated region
    $region14: #{tpu_custom_call.1} parent=1 // pred_check
      _
    $region15: #{tpu_custom_call.1} parent=1 // pred_check_branch
      %50 = sbr.rel (0) target = $region17
    $region16: #{tpu_custom_call.1} parent=1 // pred_region
      %51 = dma.done [#allocation4], 256
    $region17: #{tpu_custom_call.1} parent=1 // pred_fallthru
      _
    %52 = vsyncpa [#allocation3], 1
    %53 = vsyncpa [#allocation4], 1

</llo_original>
